<compile_context>
chip_gen: v7x
topology: tpu7x:2x2x1
jax: 0.10.0
libtpu: 0.0.40
codegen_flags: <defaults>
</compile_context>

<pallas_src>
import functools

import jax
import jax.numpy as jnp
from jax.experimental import pallas as pl
from jax.experimental.pallas import tpu as pltpu


def _round_up(x: int, m: int) -> int:
    return ((x + m - 1) // m) * m


def _cdiv(a: int, b: int) -> int:
    return (a + b - 1) // b


def _generator_kernel(x_ref, w1_ref, b1_ref, w2_ref, b2_ref, w3_ref, b3_ref,
                      out_ref):
    """Fused 3-layer MLP: relu(relu(x@W1+b1)@W2+b2)@W3+b3.

    MXU operands are in the weights' dtype (bf16 by default, fp32 for strict
    parity); accumulation, bias add and ReLU are always fp32.
    """
    # x arrives at its true feature width in f32; cast in-kernel (cheap VPU op,
    # avoids an extra padded/cast copy of x in HBM).
    x = x_ref[...].astype(w1_ref.dtype)                         # (tm, d_in)

    h1 = jnp.dot(x, w1_ref[...], preferred_element_type=jnp.float32)
    h1 = jnp.maximum(h1 + b1_ref[...], 0.0)                     # fp32 ReLU

    h2 = jnp.dot(h1.astype(w2_ref.dtype), w2_ref[...],
                 preferred_element_type=jnp.float32)
    h2 = jnp.maximum(h2 + b2_ref[...], 0.0)                     # fp32 ReLU

    y = jnp.dot(h2.astype(w3_ref.dtype), w3_ref[...],
                preferred_element_type=jnp.float32)
    out_ref[...] = (y + b3_ref[...]).astype(out_ref.dtype)


def _generator_forward_impl(x, params, *, block_b=4096,
                            compute_dtype=jnp.bfloat16,
                            out_dtype=jnp.float32):
    """Run the fused MLP kernel.

    x: (B, input_size) float32 — passed to the kernel at true width, no pad/cast.
    params: (w1, b1, w2, b2, w3, b3) with weights as (in, out), biases (1, out).
    compute_dtype: dtype of the MXU operands (bf16 production default; fp32 for
      strict parity).
    out_dtype: dtype of the kernel output store (bf16 halves writeback bytes).
    """
    w1, b1, w2, b2, w3, b3 = params
    B, d_in = x.shape
    h = w1.shape[1]
    d_out = w3.shape[1]

    # Lane-dense padded feature dims (multiples of 128) for matmul N dims and
    # the output store.  K of the first matmul stays at true d_in.
    hp = _round_up(h, 128)
    dp_out = _round_up(d_out, 128)

    # Batch tile: large (amortize ~0.35 us/step overhead), multiple of 16 for
    # bf16 sublane packing of the hidden activations, and capped so the grid
    # has >= 2 steps when the batch is big enough to split (v7x has 2 TCs).
    b16 = _round_up(B, 16)
    tm = min(block_b, b16)
    if b16 >= 32:
        tm = min(tm, _round_up(_cdiv(b16, 2), 16))
    bp = _round_up(B, tm)
    grid = (bp // tm,)

    # Only the batch dim of x is (cheaply) padded; feature width stays d_in,
    # dtype stays f32 — the cast happens inside the kernel.
    x_p = x if bp == B else jnp.pad(x, ((0, bp - B), (0, 0)))

    def pad2(a, rows, cols, dtype):
        return jnp.pad(a, ((0, rows - a.shape[0]),
                           (0, cols - a.shape[1]))).astype(dtype)

    w1_p = pad2(w1, d_in, hp, compute_dtype)      # K stays d_in (no relayout)
    w2_p = pad2(w2, hp, hp, compute_dtype)
    w3_p = pad2(w3, hp, dp_out, compute_dtype)
    b1_p = pad2(b1, 1, hp, jnp.float32)
    b2_p = pad2(b2, 1, hp, jnp.float32)
    b3_p = pad2(b3, 1, dp_out, jnp.float32)

    out_padded = pl.pallas_call(
        _generator_kernel,
        out_shape=jax.ShapeDtypeStruct((bp, dp_out), out_dtype),
        grid=grid,
        in_specs=[
            # x streams per batch tile at its true (narrow) feature width.
            pl.BlockSpec((tm, d_in), lambda i: (i, 0)),
            # Weights / biases: constant index maps -> VMEM-resident.
            pl.BlockSpec((d_in, hp), lambda i: (0, 0)),
            pl.BlockSpec((1, hp), lambda i: (0, 0)),
            pl.BlockSpec((hp, hp), lambda i: (0, 0)),
            pl.BlockSpec((1, hp), lambda i: (0, 0)),
            pl.BlockSpec((hp, dp_out), lambda i: (0, 0)),
            pl.BlockSpec((1, dp_out), lambda i: (0, 0)),
        ],
        out_specs=pl.BlockSpec((tm, dp_out), lambda i: (i, 0)),
        compiler_params=pltpu.CompilerParams(
            dimension_semantics=("parallel",)),
    )(x_p, w1_p, b1_p, w2_p, b2_p, w3_p, b3_p)

    # Slice stays under the same jit so it can fuse into a downstream consumer.
    return out_padded[:B, :d_out]


generator_forward = jax.jit(
    _generator_forward_impl,
    static_argnames=("block_b", "compute_dtype", "out_dtype"))


def init_generator_params(key, input_size, hidden_size, output_size):
    """Deterministic init mirroring nn.Linear's Kaiming-uniform default.

    Weights are stored as (in_features, out_features) for the x @ W layout.
    """
    def linear_init(k, fan_in, fan_out):
        kw, kb = jax.random.split(k)
        bound = 1.0 / jnp.sqrt(fan_in)
        w = jax.random.uniform(kw, (fan_in, fan_out), jnp.float32,
                               minval=-bound, maxval=bound)
        b = jax.random.uniform(kb, (1, fan_out), jnp.float32,
                               minval=-bound, maxval=bound)
        return w, b

    k1, k2, k3 = jax.random.split(key, 3)
    w1, b1 = linear_init(k1, input_size, hidden_size)
    w2, b2 = linear_init(k2, hidden_size, hidden_size)
    w3, b3 = linear_init(k3, hidden_size, output_size)
    return (w1, b1, w2, b2, w3, b3)


def generator_reference(x, params, compute_dtype=jnp.float32):
    """Plain-JAX reference mirroring the kernel's dtype policy."""
    w1, b1, w2, b2, w3, b3 = params
    cd = compute_dtype
    h = jnp.dot(x.astype(cd), w1.astype(cd),
                preferred_element_type=jnp.float32) + b1
    h = jnp.maximum(h, 0.0)
    h = jnp.dot(h.astype(cd), w2.astype(cd),
                preferred_element_type=jnp.float32) + b2
    h = jnp.maximum(h, 0.0)
    return jnp.dot(h.astype(cd), w3.astype(cd),
                   preferred_element_type=jnp.float32) + b3


if __name__ == "__main__":
    # Small shapes consistent with the module: Generator(input_size=8,
    # hidden_size=64, output_size=16), batch = 4.
    batch = 4
    input_size = 8
    hidden_size = 64
    output_size = 16

    key = jax.random.PRNGKey(0)
    k_params, k_x = jax.random.split(key)

    params = init_generator_params(k_params, input_size, hidden_size,
                                   output_size)
    x = jax.random.normal(k_x, (batch, input_size), jnp.float32)

    # Strict-parity fp32 path (operands and output f32).
    out_f32 = generator_forward(x, params, compute_dtype=jnp.float32,
                                out_dtype=jnp.float32)
    out_f32 = jax.block_until_ready(out_f32)
    ref_f32 = generator_reference(x, params, compute_dtype=jnp.float32)
    assert out_f32.shape == (batch, output_size)
    assert jnp.allclose(out_f32, ref_f32, atol=1e-5, rtol=1e-5), \
        "fp32 mismatch vs reference"

    # Production bf16-MXU path (fp32 accumulation), checked against a
    # reference that applies the same operand casts.
    out_bf16 = generator_forward(x, params, compute_dtype=jnp.bfloat16,
                                 out_dtype=jnp.float32)
    out_bf16 = jax.block_until_ready(out_bf16)
    ref_bf16 = generator_reference(x, params, compute_dtype=jnp.bfloat16)
    assert out_bf16.shape == (batch, output_size)
    assert jnp.allclose(out_bf16, ref_bf16, atol=5e-3, rtol=5e-3), \
        "bf16 mismatch vs reference"

    print("KERNEL_OK")
</pallas_src>

<mosaic_0001>
module attributes {stable_mosaic.version = 11 : i64} {
  func.func @_generator_kernel(%arg0: i32, %arg1: memref<16x8xf32, #tpu.memory_space<vmem>>, %arg2: memref<8x128xf32, #tpu.memory_space<vmem>>, %arg3: memref<1x128xf32, #tpu.memory_space<vmem>>, %arg4: memref<128x128xf32, #tpu.memory_space<vmem>>, %arg5: memref<1x128xf32, #tpu.memory_space<vmem>>, %arg6: memref<128x128xf32, #tpu.memory_space<vmem>>, %arg7: memref<1x128xf32, #tpu.memory_space<vmem>>, %arg8: memref<16x128xf32, #tpu.memory_space<vmem>>) attributes {dimension_semantics = [#tpu.dimension_semantics<parallel>], iteration_bounds = array<i64: 1>, scalar_prefetch = 0 : i64, scratch_operands = 0 : i64, tpu.core_type = #tpu.core_type<tc>, window_params = [{transform_indices = @transform_0, window_bounds = array<i64: 16, 8>}, {pipeline_mode = #tpu.pipeline_mode<synchronous>, transform_indices = @transform_1, window_bounds = array<i64: 8, 128>}, {pipeline_mode = #tpu.pipeline_mode<synchronous>, transform_indices = @transform_2, window_bounds = array<i64: 1, 128>}, {pipeline_mode = #tpu.pipeline_mode<synchronous>, transform_indices = @transform_3, window_bounds = array<i64: 128, 128>}, {pipeline_mode = #tpu.pipeline_mode<synchronous>, transform_indices = @transform_4, window_bounds = array<i64: 1, 128>}, {pipeline_mode = #tpu.pipeline_mode<synchronous>, transform_indices = @transform_5, window_bounds = array<i64: 128, 128>}, {pipeline_mode = #tpu.pipeline_mode<synchronous>, transform_indices = @transform_6, window_bounds = array<i64: 1, 128>}, {transform_indices = @transform_7, window_bounds = array<i64: 16, 128>}]} {
    %c0 = arith.constant 0 : index
    %c0_0 = arith.constant 0 : index
    %0 = vector.load %arg1[%c0, %c0_0] : memref<16x8xf32, #tpu.memory_space<vmem>>, vector<16x8xf32>
    %c0_1 = arith.constant 0 : index
    %c0_2 = arith.constant 0 : index
    %1 = vector.load %arg2[%c0_1, %c0_2] : memref<8x128xf32, #tpu.memory_space<vmem>>, vector<8x128xf32>
    %cst = arith.constant dense<0.000000e+00> : vector<16x128xf32>
    %2 = tpu.matmul %0, %1, %cst {dimension_numbers = #tpu.dot_dimension_numbers<[1], [0], [0], [1], [0, 0, 1, 1], [], []>} : vector<16x8xf32>, vector<8x128xf32>, vector<16x128xf32> -> vector<16x128xf32>
    %c0_3 = arith.constant 0 : index
    %c0_4 = arith.constant 0 : index
    %3 = vector.load %arg3[%c0_3, %c0_4] : memref<1x128xf32, #tpu.memory_space<vmem>>, vector<1x128xf32>
    %4 = vector.broadcast %3 : vector<1x128xf32> to vector<16x128xf32>
    %5 = arith.addf %2, %4 : vector<16x128xf32>
    %cst_5 = arith.constant 0.000000e+00 : f32
    %6 = vector.broadcast %cst_5 : f32 to vector<16x128xf32>
    %7 = arith.maximumf %5, %6 : vector<16x128xf32>
    %c0_6 = arith.constant 0 : index
    %c0_7 = arith.constant 0 : index
    %8 = vector.load %arg4[%c0_6, %c0_7] : memref<128x128xf32, #tpu.memory_space<vmem>>, vector<128x128xf32>
    %cst_8 = arith.constant dense<0.000000e+00> : vector<16x128xf32>
    %9 = tpu.matmul %7, %8, %cst_8 {dimension_numbers = #tpu.dot_dimension_numbers<[1], [0], [0], [1], [0, 0, 1, 1], [], []>} : vector<16x128xf32>, vector<128x128xf32>, vector<16x128xf32> -> vector<16x128xf32>
    %c0_9 = arith.constant 0 : index
    %c0_10 = arith.constant 0 : index
    %10 = vector.load %arg5[%c0_9, %c0_10] : memref<1x128xf32, #tpu.memory_space<vmem>>, vector<1x128xf32>
    %11 = vector.broadcast %10 : vector<1x128xf32> to vector<16x128xf32>
    %12 = arith.addf %9, %11 : vector<16x128xf32>
    %cst_11 = arith.constant 0.000000e+00 : f32
    %13 = vector.broadcast %cst_11 : f32 to vector<16x128xf32>
    %14 = arith.maximumf %12, %13 : vector<16x128xf32>
    %c0_12 = arith.constant 0 : index
    %c0_13 = arith.constant 0 : index
    %15 = vector.load %arg6[%c0_12, %c0_13] : memref<128x128xf32, #tpu.memory_space<vmem>>, vector<128x128xf32>
    %cst_14 = arith.constant dense<0.000000e+00> : vector<16x128xf32>
    %16 = tpu.matmul %14, %15, %cst_14 {dimension_numbers = #tpu.dot_dimension_numbers<[1], [0], [0], [1], [0, 0, 1, 1], [], []>} : vector<16x128xf32>, vector<128x128xf32>, vector<16x128xf32> -> vector<16x128xf32>
    %c0_15 = arith.constant 0 : index
    %c0_16 = arith.constant 0 : index
    %17 = vector.load %arg7[%c0_15, %c0_16] : memref<1x128xf32, #tpu.memory_space<vmem>>, vector<1x128xf32>
    %18 = vector.broadcast %17 : vector<1x128xf32> to vector<16x128xf32>
    %19 = arith.addf %16, %18 : vector<16x128xf32>
    %c0_17 = arith.constant 0 : index
    %c0_18 = arith.constant 0 : index
    %20 = vector.load %arg8[%c0_17, %c0_18] : memref<16x128xf32, #tpu.memory_space<vmem>>, vector<16x128xf32>
    tpu.vector_store %arg8[%c0_17, %c0_18], %19 {strides = array<i32>} : memref<16x128xf32, #tpu.memory_space<vmem>>, vector<16x128xf32>,
    return
  }
  func.func @transform_0(%arg0: i32) -> (i32, i32) {
    %c0_i32 = arith.constant 0 : i32
    %c0_i32_0 = arith.constant 0 : i32
    return %arg0, %c0_i32 : i32, i32
  }
  func.func @transform_1(%arg0: i32) -> (i32, i32) {
    %c0_i32 = arith.constant 0 : i32
    %c0_i32_0 = arith.constant 0 : i32
    %c0_i32_1 = arith.constant 0 : i32
    return %c0_i32, %c0_i32_0 : i32, i32
  }
  func.func @transform_2(%arg0: i32) -> (i32, i32) {
    %c0_i32 = arith.constant 0 : i32
    %c0_i32_0 = arith.constant 0 : i32
    %c0_i32_1 = arith.constant 0 : i32
    return %c0_i32, %c0_i32_0 : i32, i32
  }
  func.func @transform_3(%arg0: i32) -> (i32, i32) {
    %c0_i32 = arith.constant 0 : i32
    %c0_i32_0 = arith.constant 0 : i32
    %c0_i32_1 = arith.constant 0 : i32
    return %c0_i32, %c0_i32_0 : i32, i32
  }
  func.func @transform_4(%arg0: i32) -> (i32, i32) {
    %c0_i32 = arith.constant 0 : i32
    %c0_i32_0 = arith.constant 0 : i32
    %c0_i32_1 = arith.constant 0 : i32
    return %c0_i32, %c0_i32_0 : i32, i32
  }
  func.func @transform_5(%arg0: i32) -> (i32, i32) {
    %c0_i32 = arith.constant 0 : i32
    %c0_i32_0 = arith.constant 0 : i32
    %c0_i32_1 = arith.constant 0 : i32
    return %c0_i32, %c0_i32_0 : i32, i32
  }
  func.func @transform_6(%arg0: i32) -> (i32, i32) {
    %c0_i32 = arith.constant 0 : i32
    %c0_i32_0 = arith.constant 0 : i32
    %c0_i32_1 = arith.constant 0 : i32
    return %c0_i32, %c0_i32_0 : i32, i32
  }
  func.func @transform_7(%arg0: i32) -> (i32, i32) {
    %c0_i32 = arith.constant 0 : i32
    %c0_i32_0 = arith.constant 0 : i32
    return %arg0, %c0_i32 : i32, i32
  }
}

</mosaic_0001>

<llo_original>
// kernel: _generator_forward_impl.1
$region0: #{_generator_forward_impl.1}
  #allocation0 [shape = 'u32[]', space=smem, size = 0x4, offset = 0x4, fixed_abs, tag = 'smem constant byte address 0x4 - core index']
  #allocation1 [shape = 'u32[144,128]{1,0:T(1,128)}', space=vmem, size = 0x12000, scoped, tag = 'internal scratch']
  %s0 = inlined_call_operand.vmem [shape: f32[16,8], index: 0, kind: input, shape index: {}]
  %s1 = inlined_call_operand.vmem [shape: f32[8,128], index: 1, kind: input, shape index: {}]
  %s2 = inlined_call_operand.vmem [shape: f32[1,128], index: 2, kind: input, shape index: {}]
  %s3 = inlined_call_operand.vmem [shape: f32[128,128], index: 3, kind: input, shape index: {}]
  %s4 = inlined_call_operand.vmem [shape: f32[1,128], index: 4, kind: input, shape index: {}]
  %s5 = inlined_call_operand.vmem [shape: f32[128,128], index: 5, kind: input, shape index: {}]
  %s6 = inlined_call_operand.vmem [shape: f32[1,128], index: 6, kind: input, shape index: {}]
  %s7 = inlined_call_operand.vmem [shape: f32[16,128], index: 7, kind: output, shape index: {}]
  %s8 = sld [smem:[#allocation0]]
  $region38: #{_generator_forward_impl.1} parent=0
    _
  %s10 = ssub.s32 1, %s8
  %s11 = scalar_select 0, %s10, %s8
  // Predicated region
  $region2: #{_generator_forward_impl.1} parent=0 // pred_check
    _
  $region3: #{_generator_forward_impl.1} parent=0 // pred_check_branch
    %13 = sbr.rel (0) target = $region5
  $region4: #{_generator_forward_impl.1} parent=0 // pred_region
    _
  $region5: #{_generator_forward_impl.1} parent=0 // pred_fallthru
    _
  // Predicated region
  $region6: #{_generator_forward_impl.1} parent=0 // pred_check
    _
  $region7: #{_generator_forward_impl.1} parent=0 // pred_check_branch
    %15 = sbr.rel (0) target = $region9
  $region8: #{_generator_forward_impl.1} parent=0 // pred_region
    _
  $region9: #{_generator_forward_impl.1} parent=0 // pred_fallthru
    _
  // Predicated region
  $region10: #{_generator_forward_impl.1} parent=0 // pred_check
    _
  $region11: #{_generator_forward_impl.1} parent=0 // pred_check_branch
    %17 = sbr.rel (0) target = $region13
  $region12: #{_generator_forward_impl.1} parent=0 // pred_region
    _
  $region13: #{_generator_forward_impl.1} parent=0 // pred_fallthru
    _
  // Predicated region
  $region14: #{_generator_forward_impl.1} parent=0 // pred_check
    _
  $region15: #{_generator_forward_impl.1} parent=0 // pred_check_branch
    %19 = sbr.rel (0) target = $region17
  $region16: #{_generator_forward_impl.1} parent=0 // pred_region
    _
  $region17: #{_generator_forward_impl.1} parent=0 // pred_fallthru
    _
  // Predicated region
  $region18: #{_generator_forward_impl.1} parent=0 // pred_check
    _
  $region19: #{_generator_forward_impl.1} parent=0 // pred_check_branch
    %21 = sbr.rel (0) target = $region21
  $region20: #{_generator_forward_impl.1} parent=0 // pred_region
    _
  $region21: #{_generator_forward_impl.1} parent=0 // pred_fallthru
    _
  // Predicated region
  $region22: #{_generator_forward_impl.1} parent=0 // pred_check
    _
  $region23: #{_generator_forward_impl.1} parent=0 // pred_check_branch
    %23 = sbr.rel (0) target = $region25
  $region24: #{_generator_forward_impl.1} parent=0 // pred_region
    _
  $region25: #{_generator_forward_impl.1} parent=0 // pred_fallthru
    _
  // Predicated region
  $region26: #{_generator_forward_impl.1} parent=0 // pred_check
    _
  $region27: #{_generator_forward_impl.1} parent=0 // pred_check_branch
    %25 = sbr.rel (0) target = $region29
  $region28: #{_generator_forward_impl.1} parent=0 // pred_region
    _
  $region29: #{_generator_forward_impl.1} parent=0 // pred_fallthru
    _
  %v26 = vld [vmem:[%s0] sm:$0xff]
  %v27 = vld [vmem:[%s0 + $0x8] sm:$0xff]
  %v28 = vld [vmem:[%s1] sm:$0xff]
  %v29 = vld [vmem:[%s2] sm:$0x1]
  %v31 = vlaneseq
  %v32 = vshrl.u32 %v31, 7
  %v33 = vsub.s32 0, %v32
  %v34 = vrot.slane %v29, %v33
  %vm36 = vcmask 64512
  %v38 = vsel %vm36, %v26, 0
  %v41 = vsel %vm36, %v27, 0
  %43 = vmatprep.subr.mxu0 0.0
  %44 = vmatpush1.msra.mxu0 %v28
  %45 = vmatprep.subr.mxu0 0.0
  %46 = vmatpush1.msra.mxu0 0.0
  %47 = vmatprep.subr.mxu0 0.0
  %48 = vmatpush1.msra.mxu0 0.0
  %49 = vmatprep.subr.mxu0 0.0
  %50 = vmatpush1.msra.mxu0 0.0
  %51 = vmatprep.subr.mxu0 0.0
  %52 = vmatpush1.msra.mxu0 0.0
  %53 = vmatprep.subr.mxu0 0.0
  %54 = vmatpush1.msra.mxu0 0.0
  %55 = vmatprep.subr.mxu0 0.0
  %56 = vmatpush1.msra.mxu0 0.0
  %57 = vmatprep.subr.mxu0 0.0
  %58 = vmatpush1.msra.mxu0 0.0
  %59 = vmatprep.subr.mxu0 0.0
  %60 = vmatpush1.msra.mxu0 0.0
  %61 = vmatprep.subr.mxu0 0.0
  %62 = vmatpush1.msra.mxu0 0.0
  %63 = vmatprep.subr.mxu0 0.0
  %64 = vmatpush1.msra.mxu0 0.0
  %65 = vmatprep.subr.mxu0 0.0
  %66 = vmatpush1.msra.mxu0 0.0
  %67 = vmatprep.subr.mxu0 0.0
  %68 = vmatpush1.msra.mxu0 0.0
  %69 = vmatprep.subr.mxu0 0.0
  %70 = vmatpush1.msra.mxu0 0.0
  %71 = vmatprep.subr.mxu0 0.0
  %72 = vmatpush1.msra.mxu0 0.0
  %73 = vmatprep.subr.mxu0 0.0
  %74 = vmatpush1.msra.mxu0 0.0
  %75 = vmatprep.subr.mxu0 0.0
  %76 = vmatpush1.msra.mxu0 0.0
  %77 = vmatprep.subr.mxu0 0.0
  %78 = vmatpush1.msra.mxu0 0.0
  %79 = vmatprep.subr.mxu0 0.0
  %80 = vmatpush1.msra.mxu0 0.0
  %81 = vmatprep.subr.mxu0 0.0
  %82 = vmatpush1.msra.mxu0 0.0
  %83 = vmatprep.subr.mxu0 0.0
  %84 = vmatpush1.msra.mxu0 0.0
  %85 = vmatprep.subr.mxu0 0.0
  %86 = vmatpush1.msra.mxu0 0.0
  %87 = vmatprep.subr.mxu0 0.0
  %88 = vmatpush1.msra.mxu0 0.0
  %89 = vmatprep.subr.mxu0 0.0
  %90 = vmatpush1.msra.mxu0 0.0
  %91 = vmatprep.subr.mxu0 0.0
  %92 = vmatpush1.msra.mxu0 0.0
  %93 = vmatprep.subr.mxu0 0.0
  %94 = vmatpush1.msra.mxu0 0.0
  %95 = vmatprep.subr.mxu0 0.0
  %96 = vmatpush1.msra.mxu0 0.0
  %97 = vmatprep.subr.mxu0 0.0
  %98 = vmatpush1.msra.mxu0 0.0
  %99 = vmatprep.subr.mxu0 0.0
  %100 = vmatpush1.msra.mxu0 0.0
  %101 = vmatprep.subr.mxu0 0.0
  %102 = vmatpush1.msra.mxu0 0.0
  %103 = vmatprep.subr.mxu0 0.0
  %104 = vmatpush1.msra.mxu0 0.0
  %105 = vmatprep.subr.mxu0 0.0
  %106 = vmatpush1.msra.mxu0 0.0
  %107 = vmatprep.mubr.f32.mxu0 0.0
  %108 = vmatmul.mubr.f32.gmra.mrb[0].mxu0 %v38
  %v109 = vpop.f32.mrb[0].mxu0
  %v110 = vadd.f32 %v34, %v109
  %v111 = vpop.f32.mrb[0].mxu0
  %112 = vmatprep.mubr.f32.mxu0 0.0
  %113 = vmatmul.mubr.f32.gmra.mrb[0].mxu0 %v41
  %v114 = vpop.f32.mrb[0].mxu0
  %v115 = vadd.f32 %v34, %v114
  %v116 = vpop.f32.mrb[0].mxu0
  %117 = vdwg.mxu0
  %v118 = vmax.f32 %v110, 0.0
  %v119 = vmax.f32 %v115, 0.0
  %v120 = vld [vmem:[%s3] sm:$0xff]
  %v121 = vld [vmem:[%s3 + $0x8] sm:$0xff]
  %v122 = vld [vmem:[%s3 + $0x10] sm:$0xff]
  %v123 = vld [vmem:[%s3 + $0x18] sm:$0xff]
  %v124 = vld [vmem:[%s3 + $0x20] sm:$0xff]
  %v125 = vld [vmem:[%s3 + $0x28] sm:$0xff]
  %v126 = vld [vmem:[%s3 + $0x30] sm:$0xff]
  %v127 = vld [vmem:[%s3 + $0x38] sm:$0xff]
  %v128 = vld [vmem:[%s3 + $0x40] sm:$0xff]
  %v129 = vld [vmem:[%s3 + $0x48] sm:$0xff]
  %v130 = vld [vmem:[%s3 + $0x50] sm:$0xff]
  %v131 = vld [vmem:[%s3 + $0x58] sm:$0xff]
  %v132 = vld [vmem:[%s3 + $0x60] sm:$0xff]
  %v133 = vld [vmem:[%s3 + $0x68] sm:$0xff]
  %v134 = vld [vmem:[%s3 + $0x70] sm:$0xff]
  %v135 = vld [vmem:[%s3 + $0x78] sm:$0xff]
  %v136 = vld [vmem:[%s4] sm:$0x1]
  %v138 = vlaneseq
  %v139 = vshrl.u32 %v138, 7
  %v140 = vsub.s32 0, %v139
  %v141 = vrot.slane %v136, %v140
  %143 = vmatprep.subr.mxu0 0.0
  %144 = vmatpush1.msra.mxu0 %v120
  %145 = vmatprep.subr.mxu0 0.0
  %146 = vmatpush1.msra.mxu0 %v121
  %147 = vmatprep.subr.mxu0 0.0
  %148 = vmatpush1.msra.mxu0 %v122
  %149 = vmatprep.subr.mxu0 0.0
  %150 = vmatpush1.msra.mxu0 %v123
  %151 = vmatprep.subr.mxu0 0.0
  %152 = vmatpush1.msra.mxu0 %v124
  %153 = vmatprep.subr.mxu0 0.0
  %154 = vmatpush1.msra.mxu0 %v125
  %155 = vmatprep.subr.mxu0 0.0
  %156 = vmatpush1.msra.mxu0 %v126
  %157 = vmatprep.subr.mxu0 0.0
  %158 = vmatpush1.msra.mxu0 %v127
  %159 = vmatprep.subr.mxu0 0.0
  %160 = vmatpush1.msra.mxu0 %v128
  %161 = vmatprep.subr.mxu0 0.0
  %162 = vmatpush1.msra.mxu0 %v129
  %163 = vmatprep.subr.mxu0 0.0
  %164 = vmatpush1.msra.mxu0 %v130
  %165 = vmatprep.subr.mxu0 0.0
  %166 = vmatpush1.msra.mxu0 %v131
  %167 = vmatprep.subr.mxu0 0.0
  %168 = vmatpush1.msra.mxu0 %v132
  %169 = vmatprep.subr.mxu0 0.0
  %170 = vmatpush1.msra.mxu0 %v133
  %171 = vmatprep.subr.mxu0 0.0
  %172 = vmatpush1.msra.mxu0 %v134
  %173 = vmatprep.subr.mxu0 0.0
  %174 = vmatpush1.msra.mxu0 %v135
  %175 = vmatprep.subr.mxu0 0.0
  %176 = vmatpush1.msra.mxu0 0.0
  %177 = vmatprep.subr.mxu0 0.0
  %178 = vmatpush1.msra.mxu0 0.0
  %179 = vmatprep.subr.mxu0 0.0
  %180 = vmatpush1.msra.mxu0 0.0
  %181 = vmatprep.subr.mxu0 0.0
  %182 = vmatpush1.msra.mxu0 0.0
  %183 = vmatprep.subr.mxu0 0.0
  %184 = vmatpush1.msra.mxu0 0.0
  %185 = vmatprep.subr.mxu0 0.0
  %186 = vmatpush1.msra.mxu0 0.0
  %187 = vmatprep.subr.mxu0 0.0
  %188 = vmatpush1.msra.mxu0 0.0
  %189 = vmatprep.subr.mxu0 0.0
  %190 = vmatpush1.msra.mxu0 0.0
  %191 = vmatprep.subr.mxu0 0.0
  %192 = vmatpush1.msra.mxu0 0.0
  %193 = vmatprep.subr.mxu0 0.0
  %194 = vmatpush1.msra.mxu0 0.0
  %195 = vmatprep.subr.mxu0 0.0
  %196 = vmatpush1.msra.mxu0 0.0
  %197 = vmatprep.subr.mxu0 0.0
  %198 = vmatpush1.msra.mxu0 0.0
  %199 = vmatprep.subr.mxu0 0.0
  %200 = vmatpush1.msra.mxu0 0.0
  %201 = vmatprep.subr.mxu0 0.0
  %202 = vmatpush1.msra.mxu0 0.0
  %203 = vmatprep.subr.mxu0 0.0
  %204 = vmatpush1.msra.mxu0 0.0
  %205 = vmatprep.subr.mxu0 0.0
  %206 = vmatpush1.msra.mxu0 0.0
  %207 = vmatprep.mubr.f32.mxu0 0.0
  %208 = vmatmul.mubr.f32.gmra.mrb[0].mxu0 %v118
  %v209 = vpop.f32.mrb[0].mxu0
  %v210 = vadd.f32 %v141, %v209
  %v211 = vpop.f32.mrb[0].mxu0
  %212 = vmatprep.mubr.f32.mxu0 0.0
  %213 = vmatmul.mubr.f32.gmra.mrb[0].mxu0 %v119
  %v214 = vpop.f32.mrb[0].mxu0
  %v215 = vadd.f32 %v141, %v214
  %v216 = vpop.f32.mrb[0].mxu0
  %217 = vdwg.mxu0
  %v218 = vmax.f32 %v210, 0.0
  %v219 = vmax.f32 %v215, 0.0
  %v220 = vld [vmem:[%s5] sm:$0xff]
  %v221 = vld [vmem:[%s5 + $0x8] sm:$0xff]
  %v222 = vld [vmem:[%s5 + $0x10] sm:$0xff]
  %v223 = vld [vmem:[%s5 + $0x18] sm:$0xff]
  %v224 = vld [vmem:[%s5 + $0x20] sm:$0xff]
  %v225 = vld [vmem:[%s5 + $0x28] sm:$0xff]
  %v226 = vld [vmem:[%s5 + $0x30] sm:$0xff]
  %v227 = vld [vmem:[%s5 + $0x38] sm:$0xff]
  %v228 = vld [vmem:[%s5 + $0x40] sm:$0xff]
  %v229 = vld [vmem:[%s5 + $0x48] sm:$0xff]
  %v230 = vld [vmem:[%s5 + $0x50] sm:$0xff]
  %v231 = vld [vmem:[%s5 + $0x58] sm:$0xff]
  %v232 = vld [vmem:[%s5 + $0x60] sm:$0xff]
  %v233 = vld [vmem:[%s5 + $0x68] sm:$0xff]
  %v234 = vld [vmem:[%s5 + $0x70] sm:$0xff]
  %v235 = vld [vmem:[%s5 + $0x78] sm:$0xff]
  %v236 = vld [vmem:[%s6] sm:$0x1]
  %v238 = vlaneseq
  %v239 = vshrl.u32 %v238, 7
  %v240 = vsub.s32 0, %v239
  %v241 = vrot.slane %v236, %v240
  %243 = vmatprep.subr.mxu0 0.0
  %244 = vmatpush1.msra.mxu0 %v220
  %245 = vmatprep.subr.mxu0 0.0
  %246 = vmatpush1.msra.mxu0 %v221
  %247 = vmatprep.subr.mxu0 0.0
  %248 = vmatpush1.msra.mxu0 %v222
  %249 = vmatprep.subr.mxu0 0.0
  %250 = vmatpush1.msra.mxu0 %v223
  %251 = vmatprep.subr.mxu0 0.0
  %252 = vmatpush1.msra.mxu0 %v224
  %253 = vmatprep.subr.mxu0 0.0
  %254 = vmatpush1.msra.mxu0 %v225
  %255 = vmatprep.subr.mxu0 0.0
  %256 = vmatpush1.msra.mxu0 %v226
  %257 = vmatprep.subr.mxu0 0.0
  %258 = vmatpush1.msra.mxu0 %v227
  %259 = vmatprep.subr.mxu0 0.0
  %260 = vmatpush1.msra.mxu0 %v228
  %261 = vmatprep.subr.mxu0 0.0
  %262 = vmatpush1.msra.mxu0 %v229
  %263 = vmatprep.subr.mxu0 0.0
  %264 = vmatpush1.msra.mxu0 %v230
  %265 = vmatprep.subr.mxu0 0.0
  %266 = vmatpush1.msra.mxu0 %v231
  %267 = vmatprep.subr.mxu0 0.0
  %268 = vmatpush1.msra.mxu0 %v232
  %269 = vmatprep.subr.mxu0 0.0
  %270 = vmatpush1.msra.mxu0 %v233
  %271 = vmatprep.subr.mxu0 0.0
  %272 = vmatpush1.msra.mxu0 %v234
  %273 = vmatprep.subr.mxu0 0.0
  %274 = vmatpush1.msra.mxu0 %v235
  %275 = vmatprep.subr.mxu0 0.0
  %276 = vmatpush1.msra.mxu0 0.0
  %277 = vmatprep.subr.mxu0 0.0
  %278 = vmatpush1.msra.mxu0 0.0
  %279 = vmatprep.subr.mxu0 0.0
  %280 = vmatpush1.msra.mxu0 0.0
  %281 = vmatprep.subr.mxu0 0.0
  %282 = vmatpush1.msra.mxu0 0.0
  %283 = vmatprep.subr.mxu0 0.0
  %284 = vmatpush1.msra.mxu0 0.0
  %285 = vmatprep.subr.mxu0 0.0
  %286 = vmatpush1.msra.mxu0 0.0
  %287 = vmatprep.subr.mxu0 0.0
  %288 = vmatpush1.msra.mxu0 0.0
  %289 = vmatprep.subr.mxu0 0.0
  %290 = vmatpush1.msra.mxu0 0.0
  %291 = vmatprep.subr.mxu0 0.0
  %292 = vmatpush1.msra.mxu0 0.0
  %293 = vmatprep.subr.mxu0 0.0
  %294 = vmatpush1.msra.mxu0 0.0
  %295 = vmatprep.subr.mxu0 0.0
  %296 = vmatpush1.msra.mxu0 0.0
  %297 = vmatprep.subr.mxu0 0.0
  %298 = vmatpush1.msra.mxu0 0.0
  %299 = vmatprep.subr.mxu0 0.0
  %300 = vmatpush1.msra.mxu0 0.0
  %301 = vmatprep.subr.mxu0 0.0
  %302 = vmatpush1.msra.mxu0 0.0
  %303 = vmatprep.subr.mxu0 0.0
  %304 = vmatpush1.msra.mxu0 0.0
  %305 = vmatprep.subr.mxu0 0.0
  %306 = vmatpush1.msra.mxu0 0.0
  %307 = vmatprep.mubr.f32.mxu0 0.0
  %308 = vmatmul.mubr.f32.gmra.mrb[0].mxu0 %v218
  %v309 = vpop.f32.mrb[0].mxu0
  %v310 = vadd.f32 %v241, %v309
  %v311 = vpop.f32.mrb[0].mxu0
  %312 = vmatprep.mubr.f32.mxu0 0.0
  %313 = vmatmul.mubr.f32.gmra.mrb[0].mxu0 %v219
  %v314 = vpop.f32.mrb[0].mxu0
  %v315 = vadd.f32 %v241, %v314
  %v316 = vpop.f32.mrb[0].mxu0
  %317 = vdwg.mxu0
  %318 = vst [vmem:[%s7] sm:$0xff] %v310
  %319 = vst [vmem:[%s7 + $0x8] sm:$0xff] %v315
  // Predicated region
  $region30: #{_generator_forward_impl.1} parent=0 // pred_check
    _
  $region31: #{_generator_forward_impl.1} parent=0 // pred_check_branch
    %321 = sbr.rel (0) target = $region33
  $region32: #{_generator_forward_impl.1} parent=0 // pred_region
    _
  $region33: #{_generator_forward_impl.1} parent=0 // pred_fallthru
    _
  // Predicated region
  $region34: #{_generator_forward_impl.1} parent=0 // pred_check
    _
  $region35: #{_generator_forward_impl.1} parent=0 // pred_check_branch
    %323 = sbr.rel (0) target = $region37
  $region36: #{_generator_forward_impl.1} parent=0 // pred_region
    _
  $region37: #{_generator_forward_impl.1} parent=0 // pred_fallthru
    _

</llo_original>
